<compile_context>
chip_gen: v6e
topology: v6e:2x2x1
jax: 0.10.0
libtpu: 0.0.40
codegen_flags: <defaults>
</compile_context>

<pallas_src>
import functools

import jax
import jax.numpy as jnp
from jax import lax
from jax.experimental import pallas as pl
from jax.experimental.pallas import tpu as pltpu


# ---------------------------------------------------------------------------
# Generation-aware VMEM policy.
# ---------------------------------------------------------------------------
def _tpu_vmem_capacity_bytes():
    """Physical VMEM per TensorCore; conservative fallback if the query fails."""
    try:
        cap = int(pltpu.get_tpu_info().vmem_capacity_bytes)
        if cap > 0:
            return cap
    except Exception:
        pass
    return 64 << 20                      # v7x-sized conservative default


def _budgets():
    phys = _tpu_vmem_capacity_bytes()
    if phys >= (100 << 20):
        # v5e / v6e class (128 MiB VMEM): keep the 2-HBM-pass fused path alive
        # as long as possible (the split path costs ~1.5x traffic).
        return dict(fused_budget=92 << 20, clamp_hi=104 << 20,
                    split_target=2 << 20)
    # v7x class (64 MiB VMEM / TC): leave ~12 MiB for compiler scratch, and use
    # larger split x-tiles (3.2 TB/s HBM -> per-step overhead matters more).
    return dict(fused_budget=40 << 20, clamp_hi=52 << 20,
                split_target=4 << 20)


def _vmem_limit_bytes(working_bytes, clamp_hi):
    """25% headroom + 2 MiB scratch; always override v5e's 16 MiB default
    scoped VMEM, never exceed the generation-specific clamp."""
    return int(min(max(working_bytes * 5 // 4 + (2 << 20), 16 << 20), clamp_hi))


def _padded_block_bytes(shape, dtype):
    """VMEM footprint of one block after (sublane, lane) tile padding:
    last dim rounded to 128 lanes, second-last to the dtype sublane multiple."""
    isz = jnp.dtype(dtype).itemsize
    sub = max(8, 32 // max(isz, 1))      # 8 (f32) / 16 (bf16) / 32 (int8)
    dims = [int(d) for d in shape]
    if dims:
        dims[-1] = -(-dims[-1] // 128) * 128
    if len(dims) >= 2:
        dims[-2] = -(-dims[-2] // sub) * sub
    total = isz
    for d in dims:
        total *= d
    return total


def _pick_channel_tile(C, HW, dtype, base, target_bytes, nchw):
    """Largest multiple of `base` dividing C whose padded x-block stays under
    the per-step target (split path)."""
    if C % base != 0:
        return C
    best = base
    t = base
    while t <= C:
        if C % t == 0:
            blk = (1, t, HW) if nchw else (1, HW, t)
            if _padded_block_bytes(blk, dtype) <= target_bytes:
                best = t
        t += base
    return best


# ---------------------------------------------------------------------------
# Fused kernel: Nb batch elements per grid step, full channel/spatial block.
# ---------------------------------------------------------------------------
def _se_fused_kernel(x_ref, wa_ref, ba_ref, wb_ref, bb_ref, o_ref, *,
                     spatial_axis, inv_hw):
    # NCHW: x (Nb, C, HW), spatial_axis=2, wa=w1 (Cr,C), wb=w2 (C,Cr),
    #       biases (Cr,1)/(C,1).
    # NHWC: x (Nb, HW, C), spatial_axis=1, wa=w1.T (C,Cr), wb=w2.T (Cr,C),
    #       biases (1,Cr)/(1,C).
    x = x_ref[...]                       # native dtype (no full f32 copy)
    nb = x.shape[0]
    # Global average pool with f32 accumulation folded into the reduce.
    pooled = jnp.sum(x, axis=spatial_axis, keepdims=True,
                     dtype=jnp.float32) * inv_hw
    wa = jnp.broadcast_to(wa_ref[...].astype(jnp.float32),
                          (nb,) + tuple(wa_ref.shape))
    wb = jnp.broadcast_to(wb_ref[...].astype(jnp.float32),
                          (nb,) + tuple(wb_ref.shape))
    ba = ba_ref[...].astype(jnp.float32)
    bb = bb_ref[...].astype(jnp.float32)
    # Batched dot_general with leading batch dims; contraction dims chosen so
    # no transposes/relayouts of minor dims are ever needed.
    dn = (((2,), (1,)), ((0,), (0,)))
    if spatial_axis == 2:                # NCHW: pooled (Nb, C, 1)
        h = lax.dot_general(wa, pooled, dn,
                            preferred_element_type=jnp.float32) + ba
        h = jnp.maximum(h, 0.0)
        s = lax.dot_general(wb, h, dn,
                            preferred_element_type=jnp.float32) + bb
    else:                                # NHWC: pooled (Nb, 1, C) -> lane-dense
        h = lax.dot_general(pooled, wa, dn,
                            preferred_element_type=jnp.float32) + ba
        h = jnp.maximum(h, 0.0)
        s = lax.dot_general(h, wb, dn,
                            preferred_element_type=jnp.float32) + bb
    s = jax.nn.sigmoid(s)
    # Elementwise scale in the input's native dtype (bf16 VALU on v6e/v7x).
    o_ref[...] = (x * s.astype(x.dtype)).astype(o_ref.dtype)


# ---------------------------------------------------------------------------
# Split path kernels: channel-tiled pool and channel-tiled scale with the
# excite recomputed in-kernel (no gates round trip through HBM / JAX).
# ---------------------------------------------------------------------------
def _pool_kernel(x_ref, p_ref, *, spatial_axis, inv_hw):
    p_ref[...] = jnp.sum(x_ref[...], axis=spatial_axis, keepdims=True,
                         dtype=jnp.float32) * inv_hw


def _scale_excite_kernel(x_ref, p_ref, wa_ref, ba_ref, wb_ref, bb_ref, o_ref, *,
                         layout_nchw):
    x = x_ref[...]                       # (1, Tc, HW) or (1, HW, Tc)
    p = p_ref[0]                         # (C, 1) or (1, C), f32
    wa = wa_ref[...].astype(jnp.float32)
    ba = ba_ref[...].astype(jnp.float32)
    wb = wb_ref[...].astype(jnp.float32)   # channel-tiled second-layer weight
    bb = bb_ref[...].astype(jnp.float32)
    if layout_nchw:
        h = jnp.maximum(jnp.dot(wa, p, preferred_element_type=jnp.float32) + ba,
                        0.0)                                   # (Cr, 1)
        s = jnp.dot(wb, h, preferred_element_type=jnp.float32) + bb  # (Tc, 1)
    else:
        h = jnp.maximum(jnp.dot(p, wa, preferred_element_type=jnp.float32) + ba,
                        0.0)                                   # (1, Cr)
        s = jnp.dot(h, wb, preferred_element_type=jnp.float32) + bb  # (1, Tc)
    s = jax.nn.sigmoid(s)
    o_ref[...] = (x * s.astype(x.dtype)).astype(o_ref.dtype)


# ---------------------------------------------------------------------------
# Wrappers
# ---------------------------------------------------------------------------
def _se_fused(x, x_flat, w1, b1, w2, b2, *, N, C, Cr, HW, layout, budgets):
    wdt = x.dtype
    isz = jnp.dtype(x.dtype).itemsize
    if layout == "NCHW":
        wa, ba = w1.astype(wdt), b1.reshape(Cr, 1).astype(wdt)
        wb, bb = w2.astype(wdt), b2.reshape(C, 1).astype(wdt)
        per_batch_blk = (1, C, HW)
        spatial_axis = 2
    else:                                # NHWC -> lane-dense stores if C%128==0
        wa, ba = w1.T.astype(wdt), b1.reshape(1, Cr).astype(wdt)
        wb, bb = w2.T.astype(wdt), b2.reshape(1, C).astype(wdt)
        per_batch_blk = (1, HW, C)
        spatial_axis = 1

    # Batch packing: amortize ~0.35 us per-step overhead for small maps.
    per_batch_padded = _padded_block_bytes(per_batch_blk, x.dtype)
    bcast_unit = int(w1.size + w2.size) * 4          # in-kernel f32 broadcast
    pack_target = min(8 << 20, budgets["fused_budget"] // 8)
    nb = 1
    for d in range(1, N + 1):
        if (N % d == 0 and d * per_batch_padded <= pack_target
                and d * bcast_unit <= (4 << 20)):
            nb = d
    blk = (nb,) + per_batch_blk[1:]

    param_padded = sum(_padded_block_bytes(a.shape, wdt)
                       for a in (wa, ba, wb, bb))
    fused_working = (4 * nb * per_batch_padded      # in + out, double-buffered
                     + 2 * param_padded
                     + nb * bcast_unit + (1 << 20))

    kernel = functools.partial(_se_fused_kernel, spatial_axis=spatial_axis,
                               inv_hw=1.0 / HW)
    cost = pl.CostEstimate(
        flops=int(N * (2 * C * HW + 4 * C * Cr)),
        transcendentals=int(N * C),
        bytes_accessed=int(2 * N * C * HW * isz
                           + (w1.size + b1.size + w2.size + b2.size) * isz))

    out_flat = pl.pallas_call(
        kernel,
        out_shape=jax.ShapeDtypeStruct(x_flat.shape, x.dtype),
        grid_spec=pltpu.PrefetchScalarGridSpec(
            num_scalar_prefetch=0,
            grid=(N // nb,),
            in_specs=[
                pl.BlockSpec(blk, lambda n: (n, 0, 0)),        # x (Nb packed)
                pl.BlockSpec(wa.shape, lambda n: (0, 0)),      # fc1 weight
                pl.BlockSpec(ba.shape, lambda n: (0, 0)),      # fc1 bias
                pl.BlockSpec(wb.shape, lambda n: (0, 0)),      # fc2 weight
                pl.BlockSpec(bb.shape, lambda n: (0, 0)),      # fc2 bias
            ],
            out_specs=pl.BlockSpec(blk, lambda n: (n, 0, 0)),
        ),
        compiler_params=pltpu.CompilerParams(
            dimension_semantics=("parallel",),
            vmem_limit_bytes=_vmem_limit_bytes(fused_working,
                                               budgets["clamp_hi"])),
        cost_estimate=cost,
    )(x_flat, wa, ba, wb, bb)
    return out_flat.reshape(x.shape)


def _se_split(x, x_flat, w1, b1, w2, b2, *, N, C, Cr, HW, layout, budgets,
              channel_tile):
    nchw = (layout == "NCHW")
    base = 8 if nchw else 128
    wdt = x.dtype
    isz = jnp.dtype(x.dtype).itemsize

    if (channel_tile is not None and C % int(channel_tile) == 0
            and int(channel_tile) % base == 0):
        Tc = int(channel_tile)
    else:
        Tc = _pick_channel_tile(C, HW, x.dtype, base,
                                budgets["split_target"], nchw)
    n_ct = C // Tc

    if nchw:                             # x_flat (N, C, HW)
        x_blk, x_idx = (1, Tc, HW), (lambda n, c: (n, c, 0))
        spatial_axis = 2
        p_shape = (N, C, 1)
        p_blk_pool, p_idx_pool = (1, Tc, 1), (lambda n, c: (n, c, 0))
        p_blk_full, p_idx_full = (1, C, 1), (lambda n, c: (n, 0, 0))
        wa, ba = w1.astype(wdt), b1.reshape(Cr, 1).astype(wdt)
        wb_full, bb_full = w2.astype(wdt), b2.reshape(C, 1).astype(wdt)
        wb_blk, wb_idx = (Tc, Cr), (lambda n, c: (c, 0))
        bb_blk, bb_idx = (Tc, 1), (lambda n, c: (c, 0))
    else:                                # x_flat (N, HW, C)
        x_blk, x_idx = (1, HW, Tc), (lambda n, c: (n, 0, c))
        spatial_axis = 1
        p_shape = (N, 1, C)
        p_blk_pool, p_idx_pool = (1, 1, Tc), (lambda n, c: (n, 0, c))
        p_blk_full, p_idx_full = (1, 1, C), (lambda n, c: (n, 0, 0))
        wa, ba = w1.T.astype(wdt), b1.reshape(1, Cr).astype(wdt)
        wb_full, bb_full = w2.T.astype(wdt), b2.reshape(1, C).astype(wdt)
        wb_blk, wb_idx = (Cr, Tc), (lambda n, c: (0, c))
        bb_blk, bb_idx = (1, Tc), (lambda n, c: (0, c))

    x_blk_padded = _padded_block_bytes(x_blk, x.dtype)

    # 1) channel-tiled global average pool (fully parallel, per-channel).
    pool_working = 2 * x_blk_padded + 2 * _padded_block_bytes(p_blk_pool,
                                                              jnp.float32)
    pooled = pl.pallas_call(
        functools.partial(_pool_kernel, spatial_axis=spatial_axis,
                          inv_hw=1.0 / HW),
        out_shape=jax.ShapeDtypeStruct(p_shape, jnp.float32),
        grid_spec=pltpu.PrefetchScalarGridSpec(
            num_scalar_prefetch=0, grid=(N, n_ct),
            in_specs=[pl.BlockSpec(x_blk, x_idx)],
            out_specs=pl.BlockSpec(p_blk_pool, p_idx_pool)),
        compiler_params=pltpu.CompilerParams(
            dimension_semantics=("parallel", "parallel"),
            vmem_limit_bytes=_vmem_limit_bytes(pool_working,
                                               budgets["clamp_hi"])),
        cost_estimate=pl.CostEstimate(
            flops=int(N * C * HW), transcendentals=0,
            bytes_accessed=int(N * C * HW * isz + N * C * 4)),
    )(x_flat)

    # 2) channel-tiled scale with the excite recomputed in-kernel from the
    #    pooled vector (tiny FLOPs; removes the gates HBM round trip and the
    #    per-step lane-padded gate DMA).
    small_padded = (_padded_block_bytes(wa.shape, wdt)
                    + _padded_block_bytes(ba.shape, wdt)
                    + _padded_block_bytes(wb_blk, wdt)
                    + _padded_block_bytes(bb_blk, wdt)
                    + _padded_block_bytes(p_blk_full, jnp.float32))
    scale_working = 4 * x_blk_padded + 2 * small_padded
    out_flat = pl.pallas_call(
        functools.partial(_scale_excite_kernel, layout_nchw=nchw),
        out_shape=jax.ShapeDtypeStruct(x_flat.shape, x.dtype),
        grid_spec=pltpu.PrefetchScalarGridSpec(
            num_scalar_prefetch=0, grid=(N, n_ct),
            in_specs=[pl.BlockSpec(x_blk, x_idx),
                      pl.BlockSpec(p_blk_full, p_idx_full),
                      pl.BlockSpec(wa.shape, lambda n, c: (0, 0)),
                      pl.BlockSpec(ba.shape, lambda n, c: (0, 0)),
                      pl.BlockSpec(wb_blk, wb_idx),
                      pl.BlockSpec(bb_blk, bb_idx)],
            out_specs=pl.BlockSpec(x_blk, x_idx)),
        compiler_params=pltpu.CompilerParams(
            dimension_semantics=("parallel", "parallel"),
            vmem_limit_bytes=_vmem_limit_bytes(scale_working,
                                               budgets["clamp_hi"])),
        cost_estimate=pl.CostEstimate(
            flops=int(N * (C * HW + n_ct * 2 * C * Cr)),
            transcendentals=int(N * n_ct * Tc),
            bytes_accessed=int(2 * N * C * HW * isz + N * C * 4)),
    )(x_flat, pooled, wa, ba, wb_full, bb_full)
    return out_flat.reshape(x.shape)


def se_module(x, w1, b1, w2, b2, *, data_format="NCHW",
              force_split=None, channel_tile=None):
    """Squeeze-and-excitation forward pass (matches the PyTorch SEModule).

    x:  (N, C, H, W) if data_format == "NCHW" (PyTorch layout, default), or
        (N, H, W, C) if data_format == "NHWC".
    w1: (C // r, C)   b1: (C // r,)   w2: (C, C // r)   b2: (C,)

    Production note: prefer NHWC with C % 128 == 0 — the output last dim is
    then lane-dense (unmasked stores) even for ragged HW (49/196/784);
    NCHW with HW not a multiple of 128 necessarily uses masked stores.
    """
    if data_format == "NCHW":
        N, C, H, W = x.shape
        x_flat = x.reshape(N, C, H * W)
        base = 8                          # channel tiles live on sublanes
        per_batch_blk = (1, C, H * W)
        param_shapes = ((w1.shape[0], C), (w1.shape[0], 1), (C, w1.shape[0]),
                        (C, 1))
    elif data_format == "NHWC":
        N, H, W, C = x.shape
        x_flat = x.reshape(N, H * W, C)
        base = 128                        # channel tiles live on lanes
        per_batch_blk = (1, H * W, C)
        param_shapes = ((C, w1.shape[0]), (1, w1.shape[0]), (w1.shape[0], C),
                        (1, C))
    else:
        raise ValueError(f"unknown data_format: {data_format!r}")

    HW = H * W
    Cr = w1.shape[0]
    budgets = _budgets()

    # ---- path selection (padded accounting; no batch-1 split heuristic) ----
    per_batch_padded = _padded_block_bytes(per_batch_blk, x.dtype)
    param_padded = sum(_padded_block_bytes(s, x.dtype) for s in param_shapes)
    fused_working_min = (4 * per_batch_padded + 2 * param_padded
                         + int(w1.size + w2.size) * 4 + (1 << 20))
    can_tile = (C % base == 0) and (C // base >= 2)
    if force_split is None:
        use_split = (fused_working_min > budgets["fused_budget"]) and can_tile
    else:
        use_split = bool(force_split) and (C % base == 0)

    if use_split:
        return _se_split(x, x_flat, w1, b1, w2, b2, N=N, C=C, Cr=Cr, HW=HW,
                         layout=data_format, budgets=budgets,
                         channel_tile=channel_tile)
    return _se_fused(x, x_flat, w1, b1, w2, b2, N=N, C=C, Cr=Cr, HW=HW,
                     layout=data_format, budgets=budgets)


# ---------------------------------------------------------------------------
# Pure-JAX references for validation.
# ---------------------------------------------------------------------------
def _reference_nchw(x, w1, b1, w2, b2):
    pooled = jnp.mean(x, axis=(2, 3))                          # (N, C)
    h = jnp.maximum(pooled @ w1.T + b1, 0.0)                   # (N, Cr)
    s = jax.nn.sigmoid(h @ w2.T + b2)                          # (N, C)
    return x * s[:, :, None, None]


def _reference_nhwc(x, w1, b1, w2, b2):
    pooled = jnp.mean(x, axis=(1, 2))                          # (N, C)
    h = jnp.maximum(pooled @ w1.T + b1, 0.0)
    s = jax.nn.sigmoid(h @ w2.T + b2)
    return x * s[:, None, None, :]


if __name__ == "__main__":
    root = jax.random.PRNGKey(0)

    # ---- Test 1: fused NCHW path (small blocks -> exercises batch packing) --
    N, C, H, W = 2, 4, 16, 16
    reduction = 2
    Cr = C // reduction
    k = jax.random.split(root, 5)
    x = jax.random.normal(k[0], (N, C, H, W), dtype=jnp.float32)
    w1 = jax.random.normal(k[1], (Cr, C), dtype=jnp.float32) * 0.1   # fc1.weight
    b1 = jax.random.normal(k[2], (Cr,), dtype=jnp.float32) * 0.1     # fc1.bias
    w2 = jax.random.normal(k[3], (C, Cr), dtype=jnp.float32) * 0.1   # fc2.weight
    b2 = jax.random.normal(k[4], (C,), dtype=jnp.float32) * 0.1      # fc2.bias

    out = jax.block_until_ready(se_module(x, w1, b1, w2, b2))
    ref = _reference_nchw(x, w1, b1, w2, b2)
    assert out.shape == x.shape
    assert jnp.allclose(out, ref, atol=1e-5, rtol=1e-5), "NCHW fused mismatch"

    # ---- Test 2: lane-dense NHWC path (C % 128 == 0, ragged HW) ----
    N2, H2, W2, C2, Cr2 = 1, 4, 4, 128, 16
    k2 = jax.random.split(jax.random.fold_in(root, 1), 5)
    x2 = jax.random.normal(k2[0], (N2, H2, W2, C2), dtype=jnp.float32)
    w1_2 = jax.random.normal(k2[1], (Cr2, C2), dtype=jnp.float32) * 0.05
    b1_2 = jax.random.normal(k2[2], (Cr2,), dtype=jnp.float32) * 0.05
    w2_2 = jax.random.normal(k2[3], (C2, Cr2), dtype=jnp.float32) * 0.05
    b2_2 = jax.random.normal(k2[4], (C2,), dtype=jnp.float32) * 0.05

    out2 = jax.block_until_ready(
        se_module(x2, w1_2, b1_2, w2_2, b2_2, data_format="NHWC"))
    ref2 = _reference_nhwc(x2, w1_2, b1_2, w2_2, b2_2)
    assert jnp.allclose(out2, ref2, atol=1e-5, rtol=1e-5), "NHWC fused mismatch"

    # ---- Test 3: split (pool -> in-kernel excite + scale), forced, NCHW ----
    N3, C3, H3, W3, Cr3 = 2, 16, 8, 8, 4
    k3 = jax.random.split(jax.random.fold_in(root, 2), 5)
    x3 = jax.random.normal(k3[0], (N3, C3, H3, W3), dtype=jnp.float32)
    w1_3 = jax.random.normal(k3[1], (Cr3, C3), dtype=jnp.float32) * 0.1
    b1_3 = jax.random.normal(k3[2], (Cr3,), dtype=jnp.float32) * 0.1
    w2_3 = jax.random.normal(k3[3], (C3, Cr3), dtype=jnp.float32) * 0.1
    b2_3 = jax.random.normal(k3[4], (C3,), dtype=jnp.float32) * 0.1

    out3 = jax.block_until_ready(
        se_module(x3, w1_3, b1_3, w2_3, b2_3,
                  force_split=True, channel_tile=8))
    ref3 = _reference_nchw(x3, w1_3, b1_3, w2_3, b2_3)
    assert jnp.allclose(out3, ref3, atol=1e-5, rtol=1e-5), "split path mismatch"

    print("KERNEL_OK")
</pallas_src>

<mosaic_0001>
module attributes {stable_mosaic.version = 11 : i64} {
  func.func @_se_fused_kernel(%arg0: i32, %arg1: memref<2x4x256xf32, #tpu.memory_space<vmem>>, %arg2: memref<2x4xf32, #tpu.memory_space<vmem>>, %arg3: memref<2x1xf32, #tpu.memory_space<vmem>>, %arg4: memref<4x2xf32, #tpu.memory_space<vmem>>, %arg5: memref<4x1xf32, #tpu.memory_space<vmem>>, %arg6: memref<2x4x256xf32, #tpu.memory_space<vmem>>) attributes {dimension_semantics = [#tpu.dimension_semantics<parallel>], iteration_bounds = array<i64: 1>, scalar_prefetch = 0 : i64, scratch_operands = 0 : i64, tpu.core_type = #tpu.core_type<tc>, window_params = [{transform_indices = @transform_0, window_bounds = array<i64: 2, 4, 256>}, {pipeline_mode = #tpu.pipeline_mode<synchronous>, transform_indices = @transform_1, window_bounds = array<i64: 2, 4>}, {pipeline_mode = #tpu.pipeline_mode<synchronous>, transform_indices = @transform_2, window_bounds = array<i64: 2, 1>}, {pipeline_mode = #tpu.pipeline_mode<synchronous>, transform_indices = @transform_3, window_bounds = array<i64: 4, 2>}, {pipeline_mode = #tpu.pipeline_mode<synchronous>, transform_indices = @transform_4, window_bounds = array<i64: 4, 1>}, {transform_indices = @transform_5, window_bounds = array<i64: 2, 4, 256>}]} {
    %c0 = arith.constant 0 : index
    %c0_0 = arith.constant 0 : index
    %c0_1 = arith.constant 0 : index
    %0 = vector.load %arg1[%c0, %c0_0, %c0_1] : memref<2x4x256xf32, #tpu.memory_space<vmem>>, vector<2x4x256xf32>
    %cst = arith.constant dense<0.000000e+00> : vector<2x4xf32>
    %1 = vector.multi_reduction <add>, %0, %cst [2] : vector<2x4x256xf32> to vector<2x4xf32>
    %2 = vector.shape_cast %1 : vector<2x4xf32> to vector<2x4x1xf32>
    %cst_2 = arith.constant 3.906250e-03 : f32
    %3 = vector.broadcast %cst_2 : f32 to vector<2x4x1xf32>
    %4 = arith.mulf %2, %3 : vector<2x4x1xf32>
    %c0_3 = arith.constant 0 : index
    %c0_4 = arith.constant 0 : index
    %5 = vector.load %arg2[%c0_3, %c0_4] : memref<2x4xf32, #tpu.memory_space<vmem>>, vector<2x4xf32>
    %6 = vector.shape_cast %5 : vector<2x4xf32> to vector<1x2x4xf32>
    %7 = vector.broadcast %6 : vector<1x2x4xf32> to vector<2x2x4xf32>
    %c0_5 = arith.constant 0 : index
    %c0_6 = arith.constant 0 : index
    %8 = vector.load %arg4[%c0_5, %c0_6] : memref<4x2xf32, #tpu.memory_space<vmem>>, vector<4x2xf32>
    %9 = vector.shape_cast %8 : vector<4x2xf32> to vector<1x4x2xf32>
    %10 = vector.broadcast %9 : vector<1x4x2xf32> to vector<2x4x2xf32>
    %c0_7 = arith.constant 0 : index
    %c0_8 = arith.constant 0 : index
    %11 = vector.load %arg3[%c0_7, %c0_8] : memref<2x1xf32, #tpu.memory_space<vmem>>, vector<2x1xf32>
    %c0_9 = arith.constant 0 : index
    %c0_10 = arith.constant 0 : index
    %12 = vector.load %arg5[%c0_9, %c0_10] : memref<4x1xf32, #tpu.memory_space<vmem>>, vector<4x1xf32>
    %cst_11 = arith.constant dense<0.000000e+00> : vector<2x2x1xf32>
    %13 = tpu.matmul %7, %4, %cst_11 {dimension_numbers = #tpu.dot_dimension_numbers<[2], [1], [1], [2], [0, 0, 0, 1, 1, 2], [0], [0]>} : vector<2x2x4xf32>, vector<2x4x1xf32>, vector<2x2x1xf32> -> vector<2x2x1xf32>
    %14 = vector.shape_cast %11 : vector<2x1xf32> to vector<1x2x1xf32>
    %15 = vector.broadcast %14 : vector<1x2x1xf32> to vector<2x2x1xf32>
    %16 = arith.addf %13, %15 : vector<2x2x1xf32>
    %cst_12 = arith.constant 0.000000e+00 : f32
    %17 = vector.broadcast %cst_12 : f32 to vector<2x2x1xf32>
    %18 = arith.maximumf %16, %17 : vector<2x2x1xf32>
    %cst_13 = arith.constant dense<0.000000e+00> : vector<2x4x1xf32>
    %19 = tpu.matmul %10, %18, %cst_13 {dimension_numbers = #tpu.dot_dimension_numbers<[2], [1], [1], [2], [0, 0, 0, 1, 1, 2], [0], [0]>} : vector<2x4x2xf32>, vector<2x2x1xf32>, vector<2x4x1xf32> -> vector<2x4x1xf32>
    %20 = vector.shape_cast %12 : vector<4x1xf32> to vector<1x4x1xf32>
    %21 = vector.broadcast %20 : vector<1x4x1xf32> to vector<2x4x1xf32>
    %22 = arith.addf %19, %21 : vector<2x4x1xf32>
    %23 = arith.negf %22 : vector<2x4x1xf32>
    %24 = math.exp %23 : vector<2x4x1xf32>
    %cst_14 = arith.constant 1.000000e+00 : f32
    %25 = vector.broadcast %cst_14 : f32 to vector<2x4x1xf32>
    %26 = arith.addf %25, %24 : vector<2x4x1xf32>
    %27 = arith.divf %25, %26 : vector<2x4x1xf32>
    %28 = vector.broadcast %27 : vector<2x4x1xf32> to vector<2x4x256xf32>
    %29 = arith.mulf %0, %28 : vector<2x4x256xf32>
    %c0_15 = arith.constant 0 : index
    %c0_16 = arith.constant 0 : index
    %c0_17 = arith.constant 0 : index
    %30 = vector.load %arg6[%c0_15, %c0_16, %c0_17] : memref<2x4x256xf32, #tpu.memory_space<vmem>>, vector<2x4x256xf32>
    tpu.vector_store %arg6[%c0_15, %c0_16, %c0_17], %29 {strides = array<i32>} : memref<2x4x256xf32, #tpu.memory_space<vmem>>, vector<2x4x256xf32>,
    return
  }
  func.func @transform_0(%arg0: i32) -> (i32, i32, i32) {
    %c0_i32 = arith.constant 0 : i32
    %c0_i32_0 = arith.constant 0 : i32
    %c0_i32_1 = arith.constant 0 : i32
    return %arg0, %c0_i32, %c0_i32_0 : i32, i32, i32
  }
  func.func @transform_1(%arg0: i32) -> (i32, i32) {
    %c0_i32 = arith.constant 0 : i32
    %c0_i32_0 = arith.constant 0 : i32
    %c0_i32_1 = arith.constant 0 : i32
    return %c0_i32, %c0_i32_0 : i32, i32
  }
  func.func @transform_2(%arg0: i32) -> (i32, i32) {
    %c0_i32 = arith.constant 0 : i32
    %c0_i32_0 = arith.constant 0 : i32
    %c0_i32_1 = arith.constant 0 : i32
    return %c0_i32, %c0_i32_0 : i32, i32
  }
  func.func @transform_3(%arg0: i32) -> (i32, i32) {
    %c0_i32 = arith.constant 0 : i32
    %c0_i32_0 = arith.constant 0 : i32
    %c0_i32_1 = arith.constant 0 : i32
    return %c0_i32, %c0_i32_0 : i32, i32
  }
  func.func @transform_4(%arg0: i32) -> (i32, i32) {
    %c0_i32 = arith.constant 0 : i32
    %c0_i32_0 = arith.constant 0 : i32
    %c0_i32_1 = arith.constant 0 : i32
    return %c0_i32, %c0_i32_0 : i32, i32
  }
  func.func @transform_5(%arg0: i32) -> (i32, i32, i32) {
    %c0_i32 = arith.constant 0 : i32
    %c0_i32_0 = arith.constant 0 : i32
    %c0_i32_1 = arith.constant 0 : i32
    return %arg0, %c0_i32, %c0_i32_0 : i32, i32, i32
  }
}

</mosaic_0001>

<llo_original>
// kernel: tpu_custom_call.1
$region0: #{tpu_custom_call.1}
  #allocation0 [shape = 'u32[]', space=smem, size = 0x4, offset = 0x4, fixed_abs, tag = 'smem constant byte address 0x4 - core index']
  #allocation1 [shape = 'u32[144,128]{1,0:T(1,128)}', space=vmem, size = 0x12000, scoped, tag = 'internal scratch']
  %s0 = inlined_call_operand.hbm [shape: f32[2,4,256], index: 0, kind: input, shape index: {}]
  %s1 = inlined_call_operand.vmem [shape: f32[2,4], index: 1, kind: input, shape index: {}]
  %s2 = inlined_call_operand.vmem [shape: f32[2,1], index: 2, kind: input, shape index: {}]
  %s3 = inlined_call_operand.vmem [shape: f32[4,2], index: 3, kind: input, shape index: {}]
  %s4 = inlined_call_operand.vmem [shape: f32[4,1], index: 4, kind: input, shape index: {}]
  %s5 = inlined_call_operand.hbm [shape: f32[2,4,256], index: 5, kind: output, shape index: {}]
  %s6 = sld [smem:[#allocation0]]
  $region34: #{tpu_custom_call.1} parent=0
    _
  %s8 = ssub.s32 1, %s6
  %s9 = scalar_select 0, %s8, %s6
  $region1: #{tpu_custom_call.1} parent=0
    #allocation2 [shape = 'u8[8192]{0}', space=vmem, size = 0x2000, scoped, tag = 'input window, operand 0, single buffered']
    #allocation3 [shape = 's32[1]{0}', space=sflag, size = 0x4, scoped, tag = 'scoped memory for tpu_custom_call.1']
    #allocation4 [shape = 's32[1]{0}', space=sflag, size = 0x4, scoped, tag = 'scoped memory for tpu_custom_call.1']
    #allocation5 [shape = 'u8[8192]{0}', space=vmem, size = 0x2000, scoped, tag = 'output window, operand 0, single buffered']
    %10 = vsyncpa [#allocation3], 0
    %11 = vsyncpa [#allocation4], 0
    // Predicated region
    $region2: #{tpu_custom_call.1} parent=1 // pred_check
      _
    $region3: #{tpu_custom_call.1} parent=1 // pred_check_branch
      %13 = sbr.rel (0) target = $region5
    $region4: #{tpu_custom_call.1} parent=1 // pred_region
      %s15 = ssub.s32 256, 256
      %16 = vsyncadd [#allocation3], %s15
      %s17 = sshll.u32 [#allocation2], 4
      %s18 = int_to_ptr.vmem [resolvable:$true] %s17
      %23 = dma.hbm_to_vmem [thread:$0]  %s0, 256, %s18, [#allocation3], 128, 128, 8
    $region5: #{tpu_custom_call.1} parent=1 // pred_fallthru
      _
    // Predicated region
    $region6: #{tpu_custom_call.1} parent=1 // pred_check
      _
    $region7: #{tpu_custom_call.1} parent=1 // pred_check_branch
      %25 = sbr.rel (0) target = $region9
    $region8: #{tpu_custom_call.1} parent=1 // pred_region
      _
    $region9: #{tpu_custom_call.1} parent=1 // pred_fallthru
      _
    // Predicated region
    $region10: #{tpu_custom_call.1} parent=1 // pred_check
      _
    $region11: #{tpu_custom_call.1} parent=1 // pred_check_branch
      %27 = sbr.rel (0) target = $region13
    $region12: #{tpu_custom_call.1} parent=1 // pred_region
      _
    $region13: #{tpu_custom_call.1} parent=1 // pred_fallthru
      _
    // Predicated region
    $region14: #{tpu_custom_call.1} parent=1 // pred_check
      _
    $region15: #{tpu_custom_call.1} parent=1 // pred_check_branch
      %29 = sbr.rel (0) target = $region17
    $region16: #{tpu_custom_call.1} parent=1 // pred_region
      _
    $region17: #{tpu_custom_call.1} parent=1 // pred_fallthru
      _
    // Predicated region
    $region18: #{tpu_custom_call.1} parent=1 // pred_check
      _
    $region19: #{tpu_custom_call.1} parent=1 // pred_check_branch
      %31 = sbr.rel (0) target = $region21
    $region20: #{tpu_custom_call.1} parent=1 // pred_region
      _
    $region21: #{tpu_custom_call.1} parent=1 // pred_fallthru
      _
    // Predicated region
    $region22: #{tpu_custom_call.1} parent=1 // pred_check
      _
    $region23: #{tpu_custom_call.1} parent=1 // pred_check_branch
      %33 = sbr.rel (0) target = $region25
    $region24: #{tpu_custom_call.1} parent=1 // pred_region
      %34 = dma.done [#allocation3], 256
    $region25: #{tpu_custom_call.1} parent=1 // pred_fallthru
      _
    %v35 = vld [vmem:[#allocation2] sm:$0xff]
    %v36 = vld [vmem:[#allocation2 + $0x8] sm:$0xff]
    %v39 = vcombine.high %v35, %v35
    %v40 = vcombine.high %v36, %v36
    %vm43 = vcmask 1043456
    %v44 = vsel %vm43, %v35, 0.0
    %v45 = vsel %vm43, %v39, 0.0
    %v46 = vadd.f32 %v44, %v45
    %47 = vadd.xlane.f32.xlu0 %v46
    %v48 = vpop.xlane.xlu0 %47
    %v49 = vsel %vm43, %v36, 0.0
    %v50 = vsel %vm43, %v40, 0.0
    %v51 = vadd.f32 %v49, %v50
    %52 = vadd.xlane.f32.xlu0 %v51
    %v53 = vpop.xlane.xlu0 %52
    %v54 = vmul.f32 %v48, 0.00390625
    %v55 = vmul.f32 %v53, 0.00390625
    %v56 = vld [vmem:[%s1] sm:$0x3]
    %v57 = vld [vmem:[%s3] sm:$0xf]
    %v58 = vld [vmem:[%s2] sm:$0x3]
    %v59 = vld [vmem:[%s4] sm:$0xf]
    %vm60 = vcmask 31744
    %v62 = vsel %vm60, %v56, 0
    %v65 = vsel %vm43, %v54, 0
    %67 = vmatprep.subr.mxu0 0.0
    %68 = vmatpush1.msra.mxu0 0.0
    %69 = vmatprep.subr.mxu0 0.0
    %70 = vmatpush1.msra.mxu0 0.0
    %71 = vmatprep.subr.mxu0 0.0
    %72 = vmatpush1.msra.mxu0 0.0
    %73 = vmatprep.subr.mxu0 0.0
    %74 = vmatpush1.msra.mxu0 0.0
    %75 = vmatprep.subr.mxu0 0.0
    %76 = vmatpush1.msra.mxu0 0.0
    %77 = vmatprep.subr.mxu0 0.0
    %78 = vmatpush1.msra.mxu0 0.0
    %79 = vmatprep.subr.mxu0 0.0
    %80 = vmatpush1.msra.mxu0 0.0
    %81 = vmatprep.subr.mxu0 0.0
    %82 = vmatpush1.msra.mxu0 0.0
    %83 = vmatprep.subr.mxu0 0.0
    %84 = vmatpush1.msra.mxu0 0.0
    %85 = vmatprep.subr.mxu0 0.0
    %86 = vmatpush1.msra.mxu0 0.0
    %87 = vmatprep.subr.mxu0 0.0
    %88 = vmatpush1.msra.mxu0 0.0
    %89 = vmatprep.subr.mxu0 0.0
    %90 = vmatpush1.msra.mxu0 0.0
    %91 = vmatprep.subr.mxu0 0.0
    %92 = vmatpush1.msra.mxu0 0.0
    %93 = vmatprep.subr.mxu0 0.0
    %94 = vmatpush1.msra.mxu0 0.0
    %95 = vmatprep.subr.mxu0 0.0
    %96 = vmatpush1.msra.mxu0 0.0
    %97 = vmatprep.subr.mxu0 0.0
    %98 = vmatpush1.msra.mxu0 %v65
    %99 = vmatprep.subr.mxu0 0.0
    %100 = vmatpush2.msra.mxu0 0.0
    %101 = vmatprep.subr.mxu0 0.0
    %102 = vmatpush2.msra.mxu0 0.0
    %103 = vmatprep.subr.mxu0 0.0
    %104 = vmatpush2.msra.mxu0 0.0
    %105 = vmatprep.subr.mxu0 0.0
    %106 = vmatpush2.msra.mxu0 0.0
    %107 = vmatprep.subr.mxu0 0.0
    %108 = vmatpush2.msra.mxu0 0.0
    %109 = vmatprep.subr.mxu0 0.0
    %110 = vmatpush2.msra.mxu0 0.0
    %111 = vmatprep.subr.mxu0 0.0
    %112 = vmatpush2.msra.mxu0 0.0
    %113 = vmatprep.subr.mxu0 0.0
    %114 = vmatpush2.msra.mxu0 0.0
    %115 = vmatprep.subr.mxu0 0.0
    %116 = vmatpush2.msra.mxu0 0.0
    %117 = vmatprep.subr.mxu0 0.0
    %118 = vmatpush2.msra.mxu0 0.0
    %119 = vmatprep.subr.mxu0 0.0
    %120 = vmatpush2.msra.mxu0 0.0
    %121 = vmatprep.subr.mxu0 0.0
    %122 = vmatpush2.msra.mxu0 0.0
    %123 = vmatprep.subr.mxu0 0.0
    %124 = vmatpush2.msra.mxu0 0.0
    %125 = vmatprep.subr.mxu0 0.0
    %126 = vmatpush2.msra.mxu0 0.0
    %127 = vmatprep.subr.mxu0 0.0
    %128 = vmatpush2.msra.mxu0 0.0
    %129 = vmatprep.subr.mxu0 0.0
    %130 = vmatpush2.msra.mxu0 0.0
    %131 = vmatprep.mubr.f32.mxu0 0.0
    %132 = vmatmul.mubr.f32.gmra.mxu0 %v62
    %v133 = vpop.f32.mrf.mxu0
    %v134 = vadd.f32 %v58, %v133
    %v135 = vpop.f32.mrf.mxu0
    %136 = vdwg.mxu0
    %v138 = vsel %vm43, %v55, 0
    %140 = vmatprep.subr.mxu0 0.0
    %141 = vmatpush1.msra.mxu0 0.0
    %142 = vmatprep.subr.mxu0 0.0
    %143 = vmatpush1.msra.mxu0 0.0
    %144 = vmatprep.subr.mxu0 0.0
    %145 = vmatpush1.msra.mxu0 0.0
    %146 = vmatprep.subr.mxu0 0.0
    %147 = vmatpush1.msra.mxu0 0.0
    %148 = vmatprep.subr.mxu0 0.0
    %149 = vmatpush1.msra.mxu0 0.0
    %150 = vmatprep.subr.mxu0 0.0
    %151 = vmatpush1.msra.mxu0 0.0
    %152 = vmatprep.subr.mxu0 0.0
    %153 = vmatpush1.msra.mxu0 0.0
    %154 = vmatprep.subr.mxu0 0.0
    %155 = vmatpush1.msra.mxu0 0.0
    %156 = vmatprep.subr.mxu0 0.0
    %157 = vmatpush1.msra.mxu0 0.0
    %158 = vmatprep.subr.mxu0 0.0
    %159 = vmatpush1.msra.mxu0 0.0
    %160 = vmatprep.subr.mxu0 0.0
    %161 = vmatpush1.msra.mxu0 0.0
    %162 = vmatprep.subr.mxu0 0.0
    %163 = vmatpush1.msra.mxu0 0.0
    %164 = vmatprep.subr.mxu0 0.0
    %165 = vmatpush1.msra.mxu0 0.0
    %166 = vmatprep.subr.mxu0 0.0
    %167 = vmatpush1.msra.mxu0 0.0
    %168 = vmatprep.subr.mxu0 0.0
    %169 = vmatpush1.msra.mxu0 0.0
    %170 = vmatprep.subr.mxu0 0.0
    %171 = vmatpush1.msra.mxu0 %v138
    %172 = vmatprep.subr.mxu0 0.0
    %173 = vmatpush2.msra.mxu0 0.0
    %174 = vmatprep.subr.mxu0 0.0
    %175 = vmatpush2.msra.mxu0 0.0
    %176 = vmatprep.subr.mxu0 0.0
    %177 = vmatpush2.msra.mxu0 0.0
    %178 = vmatprep.subr.mxu0 0.0
    %179 = vmatpush2.msra.mxu0 0.0
    %180 = vmatprep.subr.mxu0 0.0
    %181 = vmatpush2.msra.mxu0 0.0
    %182 = vmatprep.subr.mxu0 0.0
    %183 = vmatpush2.msra.mxu0 0.0
    %184 = vmatprep.subr.mxu0 0.0
    %185 = vmatpush2.msra.mxu0 0.0
    %186 = vmatprep.subr.mxu0 0.0
    %187 = vmatpush2.msra.mxu0 0.0
    %188 = vmatprep.subr.mxu0 0.0
    %189 = vmatpush2.msra.mxu0 0.0
    %190 = vmatprep.subr.mxu0 0.0
    %191 = vmatpush2.msra.mxu0 0.0
    %192 = vmatprep.subr.mxu0 0.0
    %193 = vmatpush2.msra.mxu0 0.0
    %194 = vmatprep.subr.mxu0 0.0
    %195 = vmatpush2.msra.mxu0 0.0
    %196 = vmatprep.subr.mxu0 0.0
    %197 = vmatpush2.msra.mxu0 0.0
    %198 = vmatprep.subr.mxu0 0.0
    %199 = vmatpush2.msra.mxu0 0.0
    %200 = vmatprep.subr.mxu0 0.0
    %201 = vmatpush2.msra.mxu0 0.0
    %202 = vmatprep.subr.mxu0 0.0
    %203 = vmatpush2.msra.mxu0 0.0
    %204 = vmatprep.mubr.f32.mxu0 0.0
    %205 = vmatmul.mubr.f32.gmra.mxu0 %v62
    %v206 = vpop.f32.mrf.mxu0
    %v207 = vadd.f32 %v58, %v206
    %v208 = vpop.f32.mrf.mxu0
    %209 = vdwg.mxu0
    %v210 = vmax.f32 %v134, 0.0
    %v211 = vmax.f32 %v207, 0.0
    %vm212 = vcmask 15360
    %v214 = vsel %vm212, %v57, 0
    %vm216 = vcmask 1041408
    %v218 = vsel %vm216, %v210, 0
    %220 = vmatprep.subr.mxu0 0.0
    %221 = vmatpush1.msra.mxu0 0.0
    %222 = vmatprep.subr.mxu0 0.0
    %223 = vmatpush1.msra.mxu0 0.0
    %224 = vmatprep.subr.mxu0 0.0
    %225 = vmatpush1.msra.mxu0 0.0
    %226 = vmatprep.subr.mxu0 0.0
    %227 = vmatpush1.msra.mxu0 0.0
    %228 = vmatprep.subr.mxu0 0.0
    %229 = vmatpush1.msra.mxu0 0.0
    %230 = vmatprep.subr.mxu0 0.0
    %231 = vmatpush1.msra.mxu0 0.0
    %232 = vmatprep.subr.mxu0 0.0
    %233 = vmatpush1.msra.mxu0 0.0
    %234 = vmatprep.subr.mxu0 0.0
    %235 = vmatpush1.msra.mxu0 0.0
    %236 = vmatprep.subr.mxu0 0.0
    %237 = vmatpush1.msra.mxu0 0.0
    %238 = vmatprep.subr.mxu0 0.0
    %239 = vmatpush1.msra.mxu0 0.0
    %240 = vmatprep.subr.mxu0 0.0
    %241 = vmatpush1.msra.mxu0 0.0
    %242 = vmatprep.subr.mxu0 0.0
    %243 = vmatpush1.msra.mxu0 0.0
    %244 = vmatprep.subr.mxu0 0.0
    %245 = vmatpush1.msra.mxu0 0.0
    %246 = vmatprep.subr.mxu0 0.0
    %247 = vmatpush1.msra.mxu0 0.0
    %248 = vmatprep.subr.mxu0 0.0
    %249 = vmatpush1.msra.mxu0 0.0
    %250 = vmatprep.subr.mxu0 0.0
    %251 = vmatpush1.msra.mxu0 %v218
    %252 = vmatprep.subr.mxu0 0.0
    %253 = vmatpush2.msra.mxu0 0.0
    %254 = vmatprep.subr.mxu0 0.0
    %255 = vmatpush2.msra.mxu0 0.0
    %256 = vmatprep.subr.mxu0 0.0
    %257 = vmatpush2.msra.mxu0 0.0
    %258 = vmatprep.subr.mxu0 0.0
    %259 = vmatpush2.msra.mxu0 0.0
    %260 = vmatprep.subr.mxu0 0.0
    %261 = vmatpush2.msra.mxu0 0.0
    %262 = vmatprep.subr.mxu0 0.0
    %263 = vmatpush2.msra.mxu0 0.0
    %264 = vmatprep.subr.mxu0 0.0
    %265 = vmatpush2.msra.mxu0 0.0
    %266 = vmatprep.subr.mxu0 0.0
    %267 = vmatpush2.msra.mxu0 0.0
    %268 = vmatprep.subr.mxu0 0.0
    %269 = vmatpush2.msra.mxu0 0.0
    %270 = vmatprep.subr.mxu0 0.0
    %271 = vmatpush2.msra.mxu0 0.0
    %272 = vmatprep.subr.mxu0 0.0
    %273 = vmatpush2.msra.mxu0 0.0
    %274 = vmatprep.subr.mxu0 0.0
    %275 = vmatpush2.msra.mxu0 0.0
    %276 = vmatprep.subr.mxu0 0.0
    %277 = vmatpush2.msra.mxu0 0.0
    %278 = vmatprep.subr.mxu0 0.0
    %279 = vmatpush2.msra.mxu0 0.0
    %280 = vmatprep.subr.mxu0 0.0
    %281 = vmatpush2.msra.mxu0 0.0
    %282 = vmatprep.subr.mxu0 0.0
    %283 = vmatpush2.msra.mxu0 0.0
    %284 = vmatprep.mubr.f32.mxu0 0.0
    %285 = vmatmul.mubr.f32.gmra.mxu0 %v214
    %v286 = vpop.f32.mrf.mxu0
    %v287 = vadd.f32 %v59, %v286
    %v288 = vpop.f32.mrf.mxu0
    %289 = vdwg.mxu0
    %v291 = vsel %vm216, %v211, 0
    %293 = vmatprep.subr.mxu0 0.0
    %294 = vmatpush1.msra.mxu0 0.0
    %295 = vmatprep.subr.mxu0 0.0
    %296 = vmatpush1.msra.mxu0 0.0
    %297 = vmatprep.subr.mxu0 0.0
    %298 = vmatpush1.msra.mxu0 0.0
    %299 = vmatprep.subr.mxu0 0.0
    %300 = vmatpush1.msra.mxu0 0.0
    %301 = vmatprep.subr.mxu0 0.0
    %302 = vmatpush1.msra.mxu0 0.0
    %303 = vmatprep.subr.mxu0 0.0
    %304 = vmatpush1.msra.mxu0 0.0
    %305 = vmatprep.subr.mxu0 0.0
    %306 = vmatpush1.msra.mxu0 0.0
    %307 = vmatprep.subr.mxu0 0.0
    %308 = vmatpush1.msra.mxu0 0.0
    %309 = vmatprep.subr.mxu0 0.0
    %310 = vmatpush1.msra.mxu0 0.0
    %311 = vmatprep.subr.mxu0 0.0
    %312 = vmatpush1.msra.mxu0 0.0
    %313 = vmatprep.subr.mxu0 0.0
    %314 = vmatpush1.msra.mxu0 0.0
    %315 = vmatprep.subr.mxu0 0.0
    %316 = vmatpush1.msra.mxu0 0.0
    %317 = vmatprep.subr.mxu0 0.0
    %318 = vmatpush1.msra.mxu0 0.0
    %319 = vmatprep.subr.mxu0 0.0
    %320 = vmatpush1.msra.mxu0 0.0
    %321 = vmatprep.subr.mxu0 0.0
    %322 = vmatpush1.msra.mxu0 0.0
    %323 = vmatprep.subr.mxu0 0.0
    %324 = vmatpush1.msra.mxu0 %v291
    %325 = vmatprep.subr.mxu0 0.0
    %326 = vmatpush2.msra.mxu0 0.0
    %327 = vmatprep.subr.mxu0 0.0
    %328 = vmatpush2.msra.mxu0 0.0
    %329 = vmatprep.subr.mxu0 0.0
    %330 = vmatpush2.msra.mxu0 0.0
    %331 = vmatprep.subr.mxu0 0.0
    %332 = vmatpush2.msra.mxu0 0.0
    %333 = vmatprep.subr.mxu0 0.0
    %334 = vmatpush2.msra.mxu0 0.0
    %335 = vmatprep.subr.mxu0 0.0
    %336 = vmatpush2.msra.mxu0 0.0
    %337 = vmatprep.subr.mxu0 0.0
    %338 = vmatpush2.msra.mxu0 0.0
    %339 = vmatprep.subr.mxu0 0.0
    %340 = vmatpush2.msra.mxu0 0.0
    %341 = vmatprep.subr.mxu0 0.0
    %342 = vmatpush2.msra.mxu0 0.0
    %343 = vmatprep.subr.mxu0 0.0
    %344 = vmatpush2.msra.mxu0 0.0
    %345 = vmatprep.subr.mxu0 0.0
    %346 = vmatpush2.msra.mxu0 0.0
    %347 = vmatprep.subr.mxu0 0.0
    %348 = vmatpush2.msra.mxu0 0.0
    %349 = vmatprep.subr.mxu0 0.0
    %350 = vmatpush2.msra.mxu0 0.0
    %351 = vmatprep.subr.mxu0 0.0
    %352 = vmatpush2.msra.mxu0 0.0
    %353 = vmatprep.subr.mxu0 0.0
    %354 = vmatpush2.msra.mxu0 0.0
    %355 = vmatprep.subr.mxu0 0.0
    %356 = vmatpush2.msra.mxu0 0.0
    %357 = vmatprep.mubr.f32.mxu0 0.0
    %358 = vmatmul.mubr.f32.gmra.mxu0 %v214
    %v359 = vpop.f32.mrf.mxu0
    %v360 = vadd.f32 %v59, %v359
    %v361 = vpop.f32.mrf.mxu0
    %362 = vdwg.mxu0
    %v363 = vxor.u32 %v287, 2147483648
    %v364 = vxor.u32 %v360, 2147483648
    %v365 = vmul.f32 %v363, 1.442695
    %v366 = vpow.pop %v365
    %v367 = vmul.f32 %v364, 1.442695
    %v368 = vpow.pop %v367
    %v369 = vadd.f32 %v366, 1.0
    %v370 = vadd.f32 %v368, 1.0
    %v371 = vrcp.pop %v369
    %v372 = vmul.f32 1.0, %v371
    %v373 = vrcp.pop %v370
    %v374 = vmul.f32 1.0, %v373
    %376 = vset.pattern.permute.xlu0 0
    %377 = vperm.xlu0 %376, %v372
    %v378 = vpop.permute.xlu0 %377
    %380 = vset.pattern.permute.xlu0 0
    %381 = vperm.xlu0 %380, %v374
    %v382 = vpop.permute.xlu0 %381
    %v384 = vunpack.c.l.s4 839922192
    %v385 = vunpack.c.0.s8 %v384
    %v386 = vlaneseq
    %v387 = vshrl.u32 %v386, 7
    %v388 = vsub.s32 %v385, %v387
    %v389 = vrot.slane %v378, %v388
    %v391 = vunpack.c.l.s4 839922192
    %v392 = vunpack.c.0.s8 %v391
    %v393 = vlaneseq
    %v394 = vshrl.u32 %v393, 7
    %v395 = vsub.s32 %v392, %v394
    %v396 = vrot.slane %v382, %v395
    %v399 = vmul.f32 %v35, %v389
    %v400 = vmul.f32 %v36, %v396
    %401 = vst [vmem:[#allocation5] sm:$0xff] %v399
    %402 = vst [vmem:[#allocation5 + $0x8] sm:$0xff] %v400
    // Predicated region
    $region26: #{tpu_custom_call.1} parent=1 // pred_check
      _
    $region27: #{tpu_custom_call.1} parent=1 // pred_check_branch
      %404 = sbr.rel (0) target = $region29
    $region28: #{tpu_custom_call.1} parent=1 // pred_region
      %s406 = ssub.s32 256, 256
      %407 = vsyncadd [#allocation4], %s406
      %s408 = sshll.u32 [#allocation5], 4
      %s409 = int_to_ptr.vmem [resolvable:$true] %s408
      %414 = dma.vmem_to_hbm [thread:$0]  %s409, 256, %s5, [#allocation4], 128, 128, 8
    $region29: #{tpu_custom_call.1} parent=1 // pred_fallthru
      _
    // Predicated region
    $region30: #{tpu_custom_call.1} parent=1 // pred_check
      _
    $region31: #{tpu_custom_call.1} parent=1 // pred_check_branch
      %416 = sbr.rel (0) target = $region33
    $region32: #{tpu_custom_call.1} parent=1 // pred_region
      %417 = dma.done [#allocation4], 256
    $region33: #{tpu_custom_call.1} parent=1 // pred_fallthru
      _
    %418 = vsyncpa [#allocation3], 1
    %419 = vsyncpa [#allocation4], 1

</llo_original>
